<compile_context>
chip_gen: v5e
topology: v5e:2x2
jax: 0.10.0
libtpu: 0.0.40
codegen_flags: <defaults>
</compile_context>

<pallas_src>
import numpy as np
import jax
import jax.numpy as jnp
from jax import lax
from jax.experimental import pallas as pl
from jax.experimental.pallas import tpu as pltpu

WINDOW_SIZE = 11
SIGMA = 1.5
C1 = float(0.01 ** 2)
C2 = float(0.03 ** 2)
NSTACK = 5  # x1, x2, x1*x1, x2*x2, x1*x2


def gaussian_1d(window_size, sigma):
    xs = np.arange(window_size, dtype=np.float64)
    g = np.exp(-((xs - window_size // 2) ** 2) / (2.0 * sigma ** 2))
    return (g / g.sum()).astype(np.float32)


def band_matrix(n, g):
    """B[i, r] = g[r - i + half] (zero outside band) -> 'same' conv w/ zero pad."""
    half = len(g) // 2
    B = np.zeros((n, n), np.float32)
    for i in range(n):
        for r in range(max(0, i - half), min(n, i + half + 1)):
            B[i, r] = g[r - i + half]
    return B


def ssim_kernel(x1_ref, x2_ref, ghbd_ref, gwt_ref, out_ref):
    x1 = x1_ref[0]          # (H, L) f32, L = PBLK*W lane-stacked planes
    x2 = x2_ref[0]          # (H, L)
    H = x1.shape[0]         # static

    # Stack the five blur operands along sublanes; blur is linear, and the
    # block-diagonal matrices keep operands (left) and planes (right)
    # independent, so one pair of matmuls blurs everything at once.
    y = jnp.concatenate([x1, x2, x1 * x1, x2 * x2, x1 * x2], axis=0)  # (5H, L)
    t = jnp.dot(ghbd_ref[...], y, preferred_element_type=jnp.float32)  # row blur
    b = jnp.dot(t, gwt_ref[...], preferred_element_type=jnp.float32)   # col blur

    mu1 = b[0:H]
    mu2 = b[H:2 * H]
    mu1_sq = mu1 * mu1
    mu2_sq = mu2 * mu2
    mu1_mu2 = mu1 * mu2
    sigma1_sq = b[2 * H:3 * H] - mu1_sq
    sigma2_sq = b[3 * H:4 * H] - mu2_sq
    sigma12 = b[4 * H:5 * H] - mu1_mu2

    # Fused: (a/b) * (c/d) == (a*c) * reciprocal(b*d)
    num = (2.0 * mu1_mu2 + C1) * (2.0 * sigma12 + C2)
    den = (mu1_sq + mu2_sq + C1) * (sigma1_sq + sigma2_sq + C2)
    ssim_map = num * pl.reciprocal(den, approx=False)

    # Lane-dense per-step partial sums (reduce only over H / sublanes);
    # the cross-lane / cross-block reduction happens outside the kernel.
    out_ref[...] = jnp.sum(ssim_map, axis=0, keepdims=True)


def ssim_pallas(img1, img2):
    N, C, H, W = img1.shape
    P = N * C
    g = gaussian_1d(WINDOW_SIZE, SIGMA)

    # Planes per grid step, stacked along the lane axis -> lane dim PBLK*W.
    pblk = min(P, max(1, 128 // W)) if W < 128 else 1
    nblk = -(-P // pblk)          # ceil div
    p_pad = nblk * pblk
    L = pblk * W

    # Banded blur matrices (host-side constants).
    gh = band_matrix(H, g)                                            # (H, H)
    ghbd = jnp.asarray(np.kron(np.eye(NSTACK, dtype=np.float32), gh))  # (5H, 5H)
    gwt_bd = jnp.asarray(np.kron(np.eye(pblk, dtype=np.float32),
                                 band_matrix(W, g).T))                 # (L, L)

    def stack(img):
        x = img.reshape(P, H, W).astype(jnp.float32)
        if p_pad != P:
            x = jnp.concatenate(
                [x, jnp.zeros((p_pad - P, H, W), jnp.float32)], axis=0)
        # (NBLK, PBLK, H, W) -> (NBLK, H, PBLK*W): planes side-by-side on lanes.
        return x.reshape(nblk, pblk, H, W).transpose(0, 2, 1, 3).reshape(nblk, H, L)

    x1 = stack(img1)
    x2 = stack(img2)

    # TODO(synk): for very large H/W, tile the O((5H)^2)/O(W^2) band matrices
    # per grid axis (banded slabs) instead of shipping full square matrices.
    partial = pl.pallas_call(
        ssim_kernel,
        out_shape=jax.ShapeDtypeStruct((nblk, L), jnp.float32),
        grid_spec=pltpu.PrefetchScalarGridSpec(
            num_scalar_prefetch=0,
            grid=(nblk,),
            in_specs=[
                pl.BlockSpec((1, H, L), lambda b: (b, 0, 0)),
                pl.BlockSpec((1, H, L), lambda b: (b, 0, 0)),
                pl.BlockSpec((NSTACK * H, NSTACK * H), lambda b: (0, 0)),  # constant
                pl.BlockSpec((L, L), lambda b: (0, 0)),                    # constant
            ],
            out_specs=pl.BlockSpec((1, L), lambda b: (b, 0)),
        ),
        compiler_params=pltpu.CompilerParams(
            dimension_semantics=("parallel",),   # independent output blocks
            vmem_limit_bytes=32 * 1024 * 1024),
    )(x1, x2, ghbd, gwt_bd)

    # (NBLK, PBLK*W) -> (P_pad, W); drop padded planes; global mean outside.
    per_plane_cols = partial.reshape(p_pad, W)[:P]
    return jnp.sum(per_plane_cols) / jnp.float32(P * H * W)


def ssim_reference(img1, img2):
    """Pure-JAX reference matching the PyTorch module (depthwise conv2d)."""
    N, C, H, W = img1.shape
    g = gaussian_1d(WINDOW_SIZE, SIGMA)
    w2d = np.outer(g, g).astype(np.float32)
    window = jnp.asarray(np.broadcast_to(w2d, (C, 1, WINDOW_SIZE, WINDOW_SIZE)).copy())

    def conv(x):
        return lax.conv_general_dilated(
            x, window, window_strides=(1, 1),
            padding=[(WINDOW_SIZE // 2, WINDOW_SIZE // 2)] * 2,
            dimension_numbers=("NCHW", "OIHW", "NCHW"),
            feature_group_count=C)

    mu1 = conv(img1)
    mu2 = conv(img2)
    mu1_sq, mu2_sq, mu1_mu2 = mu1 * mu1, mu2 * mu2, mu1 * mu2
    sigma1_sq = conv(img1 * img1) - mu1_sq
    sigma2_sq = conv(img2 * img2) - mu2_sq
    sigma12 = conv(img1 * img2) - mu1_mu2
    cs_map = (2 * sigma12 + C2) / (sigma1_sq + sigma2_sq + C2)
    ssim_map = (2 * mu1_mu2 + C1) / (mu1_sq + mu2_sq + C1) * cs_map
    return jnp.mean(ssim_map)


if __name__ == "__main__":
    key = jax.random.PRNGKey(0)
    k1, k2 = jax.random.split(key)
    img1 = jax.random.uniform(k1, (2, 4, 16, 16), dtype=jnp.float32)
    img2 = jax.random.uniform(k2, (2, 4, 16, 16), dtype=jnp.float32)

    out = ssim_pallas(img1, img2)
    jax.block_until_ready(out)

    ref = ssim_reference(img1, img2)
    assert abs(float(out) - float(ref)) < 1e-5, (float(out), float(ref))

    print("KERNEL_OK")
</pallas_src>

<mosaic_0001>
module attributes {stable_mosaic.version = 11 : i64} {
  func.func @ssim_kernel(%arg0: i32, %arg1: memref<1x16x128xf32, #tpu.memory_space<vmem>>, %arg2: memref<1x16x128xf32, #tpu.memory_space<vmem>>, %arg3: memref<80x80xf32, #tpu.memory_space<vmem>>, %arg4: memref<128x128xf32, #tpu.memory_space<vmem>>, %arg5: memref<1x128xf32, #tpu.memory_space<vmem>>) attributes {dimension_semantics = [#tpu.dimension_semantics<parallel>], iteration_bounds = array<i64: 1>, scalar_prefetch = 0 : i64, scratch_operands = 0 : i64, tpu.core_type = #tpu.core_type<tc>, window_params = [{transform_indices = @transform_0, window_bounds = array<i64: 1, 16, 128>}, {transform_indices = @transform_1, window_bounds = array<i64: 1, 16, 128>}, {pipeline_mode = #tpu.pipeline_mode<synchronous>, transform_indices = @transform_2, window_bounds = array<i64: 80, 80>}, {pipeline_mode = #tpu.pipeline_mode<synchronous>, transform_indices = @transform_3, window_bounds = array<i64: 128, 128>}, {transform_indices = @transform_4, window_bounds = array<i64: 1, 128>}]} {
    %c0 = arith.constant 0 : index
    %c0_0 = arith.constant 0 : index
    %c0_1 = arith.constant 0 : index
    %0 = vector.load %arg1[%c0, %c0_0, %c0_1] : memref<1x16x128xf32, #tpu.memory_space<vmem>>, vector<1x16x128xf32>
    %1 = vector.shape_cast %0 : vector<1x16x128xf32> to vector<16x128xf32>
    %c0_2 = arith.constant 0 : index
    %c0_3 = arith.constant 0 : index
    %c0_4 = arith.constant 0 : index
    %2 = vector.load %arg2[%c0_2, %c0_3, %c0_4] : memref<1x16x128xf32, #tpu.memory_space<vmem>>, vector<1x16x128xf32>
    %3 = vector.shape_cast %2 : vector<1x16x128xf32> to vector<16x128xf32>
    %4 = arith.mulf %1, %1 : vector<16x128xf32>
    %5 = arith.mulf %3, %3 : vector<16x128xf32>
    %6 = arith.mulf %1, %3 : vector<16x128xf32>
    %7 = tpu.concatenate %1, %3, %4, %5, %6 in 0 : vector<16x128xf32>, vector<16x128xf32>, vector<16x128xf32>, vector<16x128xf32>, vector<16x128xf32> -> vector<80x128xf32>
    %c0_5 = arith.constant 0 : index
    %c0_6 = arith.constant 0 : index
    %8 = vector.load %arg3[%c0_5, %c0_6] : memref<80x80xf32, #tpu.memory_space<vmem>>, vector<80x80xf32>
    %cst = arith.constant dense<0.000000e+00> : vector<80x128xf32>
    %9 = tpu.matmul %8, %7, %cst {dimension_numbers = #tpu.dot_dimension_numbers<[1], [0], [0], [1], [0, 0, 1, 1], [], []>} : vector<80x80xf32>, vector<80x128xf32>, vector<80x128xf32> -> vector<80x128xf32>
    %c0_7 = arith.constant 0 : index
    %c0_8 = arith.constant 0 : index
    %10 = vector.load %arg4[%c0_7, %c0_8] : memref<128x128xf32, #tpu.memory_space<vmem>>, vector<128x128xf32>
    %cst_9 = arith.constant dense<0.000000e+00> : vector<80x128xf32>
    %11 = tpu.matmul %9, %10, %cst_9 {dimension_numbers = #tpu.dot_dimension_numbers<[1], [0], [0], [1], [0, 0, 1, 1], [], []>} : vector<80x128xf32>, vector<128x128xf32>, vector<80x128xf32> -> vector<80x128xf32>
    %12 = vector.extract_strided_slice %11 {offsets = [0, 0], sizes = [16, 128], strides = [1, 1]} : vector<80x128xf32> to vector<16x128xf32>
    %13 = vector.extract_strided_slice %11 {offsets = [16, 0], sizes = [16, 128], strides = [1, 1]} : vector<80x128xf32> to vector<16x128xf32>
    %14 = arith.mulf %12, %12 : vector<16x128xf32>
    %15 = arith.mulf %13, %13 : vector<16x128xf32>
    %16 = arith.mulf %12, %13 : vector<16x128xf32>
    %17 = vector.extract_strided_slice %11 {offsets = [32, 0], sizes = [16, 128], strides = [1, 1]} : vector<80x128xf32> to vector<16x128xf32>
    %18 = arith.subf %17, %14 : vector<16x128xf32>
    %19 = vector.extract_strided_slice %11 {offsets = [48, 0], sizes = [16, 128], strides = [1, 1]} : vector<80x128xf32> to vector<16x128xf32>
    %20 = arith.subf %19, %15 : vector<16x128xf32>
    %21 = vector.extract_strided_slice %11 {offsets = [64, 0], sizes = [16, 128], strides = [1, 1]} : vector<80x128xf32> to vector<16x128xf32>
    %22 = arith.subf %21, %16 : vector<16x128xf32>
    %cst_10 = arith.constant 2.000000e+00 : f32
    %23 = vector.broadcast %cst_10 : f32 to vector<16x128xf32>
    %24 = arith.mulf %23, %16 : vector<16x128xf32>
    %cst_11 = arith.constant 9.99999974E-5 : f32
    %25 = vector.broadcast %cst_11 : f32 to vector<16x128xf32>
    %26 = arith.addf %24, %25 : vector<16x128xf32>
    %cst_12 = arith.constant 2.000000e+00 : f32
    %27 = vector.broadcast %cst_12 : f32 to vector<16x128xf32>
    %28 = arith.mulf %27, %22 : vector<16x128xf32>
    %cst_13 = arith.constant 8.99999984E-4 : f32
    %29 = vector.broadcast %cst_13 : f32 to vector<16x128xf32>
    %30 = arith.addf %28, %29 : vector<16x128xf32>
    %31 = arith.mulf %26, %30 : vector<16x128xf32>
    %32 = arith.addf %14, %15 : vector<16x128xf32>
    %cst_14 = arith.constant 9.99999974E-5 : f32
    %33 = vector.broadcast %cst_14 : f32 to vector<16x128xf32>
    %34 = arith.addf %32, %33 : vector<16x128xf32>
    %35 = arith.addf %18, %20 : vector<16x128xf32>
    %cst_15 = arith.constant 8.99999984E-4 : f32
    %36 = vector.broadcast %cst_15 : f32 to vector<16x128xf32>
    %37 = arith.addf %35, %36 : vector<16x128xf32>
    %38 = arith.mulf %34, %37 : vector<16x128xf32>
    %39 = tpu.reciprocal %38 : vector<16x128xf32> -> vector<16x128xf32>
    %40 = arith.mulf %31, %39 : vector<16x128xf32>
    %cst_16 = arith.constant dense<0.000000e+00> : vector<128xf32>
    %41 = vector.multi_reduction <add>, %40, %cst_16 [0] : vector<16x128xf32> to vector<128xf32>
    %42 = vector.shape_cast %41 : vector<128xf32> to vector<1x128xf32>
    %c0_17 = arith.constant 0 : index
    %c0_18 = arith.constant 0 : index
    %43 = vector.load %arg5[%c0_17, %c0_18] : memref<1x128xf32, #tpu.memory_space<vmem>>, vector<1x128xf32>
    tpu.vector_store %arg5[%c0_17, %c0_18], %42 {strides = array<i32>} : memref<1x128xf32, #tpu.memory_space<vmem>>, vector<1x128xf32>,
    return
  }
  func.func @transform_0(%arg0: i32) -> (i32, i32, i32) {
    %c0_i32 = arith.constant 0 : i32
    %c0_i32_0 = arith.constant 0 : i32
    %c0_i32_1 = arith.constant 0 : i32
    return %arg0, %c0_i32, %c0_i32_0 : i32, i32, i32
  }
  func.func @transform_1(%arg0: i32) -> (i32, i32, i32) {
    %c0_i32 = arith.constant 0 : i32
    %c0_i32_0 = arith.constant 0 : i32
    %c0_i32_1 = arith.constant 0 : i32
    return %arg0, %c0_i32, %c0_i32_0 : i32, i32, i32
  }
  func.func @transform_2(%arg0: i32) -> (i32, i32) {
    %c0_i32 = arith.constant 0 : i32
    %c0_i32_0 = arith.constant 0 : i32
    %c0_i32_1 = arith.constant 0 : i32
    return %c0_i32, %c0_i32_0 : i32, i32
  }
  func.func @transform_3(%arg0: i32) -> (i32, i32) {
    %c0_i32 = arith.constant 0 : i32
    %c0_i32_0 = arith.constant 0 : i32
    %c0_i32_1 = arith.constant 0 : i32
    return %c0_i32, %c0_i32_0 : i32, i32
  }
  func.func @transform_4(%arg0: i32) -> (i32, i32) {
    %c0_i32 = arith.constant 0 : i32
    %c0_i32_0 = arith.constant 0 : i32
    return %arg0, %c0_i32 : i32, i32
  }
}

</mosaic_0001>

<llo_original>
// kernel: tpu_custom_call.1
$region0: #{tpu_custom_call.1}
  #allocation0 [shape = 'u32[]', space=smem, size = 0x4, offset = 0x4, fixed_abs, tag = 'smem constant byte address 0x4 - core index']
  #allocation1 [shape = 'u32[72,128]{1,0:T(1,128)}', space=vmem, size = 0x9000, scoped, tag = 'internal scratch']
  %s0 = inlined_call_operand.hbm [shape: f32[1,16,128], index: 0, kind: input, shape index: {}]
  %s1 = inlined_call_operand.hbm [shape: f32[1,16,128], index: 1, kind: input, shape index: {}]
  %s2 = inlined_call_operand.hbm [shape: f32[80,80], index: 2, kind: input, shape index: {}]
  %s3 = inlined_call_operand.hbm [shape: f32[128,128], index: 3, kind: input, shape index: {}]
  %s4 = inlined_call_operand.hbm [shape: f32[1,128], index: 4, kind: output, shape index: {}]
  %s5 = sld [smem:[#allocation0]]
  $region42: #{tpu_custom_call.1} parent=0
    _
  %s7 = ssub.s32 1, %s5
  %s8 = scalar_select 0, %s7, %s5
  $region1: #{tpu_custom_call.1} parent=0
    #allocation2 [shape = 'u8[8192]{0}', space=vmem, size = 0x2000, scoped, tag = 'input window, operand 0, single buffered']
    #allocation3 [shape = 's32[1]{0}', space=sflag, size = 0x4, scoped, tag = 'scoped memory for tpu_custom_call.1']
    #allocation4 [shape = 's32[1]{0}', space=sflag, size = 0x4, scoped, tag = 'scoped memory for tpu_custom_call.1']
    #allocation5 [shape = 'u8[8192]{0}', space=vmem, size = 0x2000, scoped, tag = 'input window, operand 1, single buffered']
    #allocation6 [shape = 's32[1]{0}', space=sflag, size = 0x4, scoped, tag = 'scoped memory for tpu_custom_call.1']
    #allocation7 [shape = 'u8[40960]{0}', space=vmem, size = 0xa000, scoped, tag = 'input window, operand 2, single buffered']
    #allocation8 [shape = 'u8[65536]{0}', space=vmem, size = 0x10000, scoped, tag = 'input window, operand 3, single buffered']
    #allocation9 [shape = 's32[1]{0}', space=sflag, size = 0x4, scoped, tag = 'scoped memory for tpu_custom_call.1']
    #allocation10 [shape = 'u8[512]{0}', space=vmem, size = 0x400, scoped, tag = 'output window, operand 0, single buffered']
    %9 = vsyncpa [#allocation3], 0
    %10 = vsyncpa [#allocation6], 0
    %11 = vsyncpa [#allocation9], 0
    %12 = vsyncpa [#allocation4], 0
    // Predicated region
    $region2: #{tpu_custom_call.1} parent=1 // pred_check
      _
    $region3: #{tpu_custom_call.1} parent=1 // pred_check_branch
      %14 = sbr.rel (0) target = $region5
    $region4: #{tpu_custom_call.1} parent=1 // pred_region
      %16 = vsyncadd [#allocation3], 0
      %s17 = sshll.u32 %s0, 4
      %s18 = int_to_ptr.hbm [resolvable:$true] %s17
      %s19 = sshll.u32 [#allocation2], 4
      %s20 = int_to_ptr.vmem [resolvable:$true] %s19
      %25 = dma.hbm_to_vmem [thread:$0]  %s18, 256, %s20, [#allocation3], 128, 128, 8
    $region5: #{tpu_custom_call.1} parent=1 // pred_fallthru
      _
    // Predicated region
    $region6: #{tpu_custom_call.1} parent=1 // pred_check
      _
    $region7: #{tpu_custom_call.1} parent=1 // pred_check_branch
      %27 = sbr.rel (0) target = $region9
    $region8: #{tpu_custom_call.1} parent=1 // pred_region
      %29 = vsyncadd [#allocation6], 0
      %s30 = sshll.u32 %s1, 4
      %s31 = int_to_ptr.hbm [resolvable:$true] %s30
      %s32 = sshll.u32 [#allocation5], 4
      %s33 = int_to_ptr.vmem [resolvable:$true] %s32
      %38 = dma.hbm_to_vmem [thread:$0]  %s31, 256, %s33, [#allocation6], 128, 128, 8
    $region9: #{tpu_custom_call.1} parent=1 // pred_fallthru
      _
    // Predicated region
    $region10: #{tpu_custom_call.1} parent=1 // pred_check
      _
    $region11: #{tpu_custom_call.1} parent=1 // pred_check_branch
      %40 = sbr.rel (0) target = $region13
    $region12: #{tpu_custom_call.1} parent=1 // pred_region
      %42 = vsyncadd [#allocation6], 0
      %s43 = sshll.u32 %s2, 4
      %s44 = int_to_ptr.hbm [resolvable:$true] %s43
      %s45 = sshll.u32 [#allocation7], 4
      %s46 = int_to_ptr.vmem [resolvable:$true] %s45
      %51 = dma.hbm_to_vmem [thread:$0]  %s44, 1280, %s46, [#allocation6], 128, 128, 8
    $region13: #{tpu_custom_call.1} parent=1 // pred_fallthru
      _
    // Predicated region
    $region14: #{tpu_custom_call.1} parent=1 // pred_check
      _
    $region15: #{tpu_custom_call.1} parent=1 // pred_check_branch
      %53 = sbr.rel (0) target = $region17
    $region16: #{tpu_custom_call.1} parent=1 // pred_region
      %55 = vsyncadd [#allocation9], 0
      %s56 = sshll.u32 %s3, 4
      %s57 = int_to_ptr.hbm [resolvable:$true] %s56
      %s58 = sshll.u32 [#allocation8], 4
      %s59 = int_to_ptr.vmem [resolvable:$true] %s58
      %64 = dma.hbm_to_vmem [thread:$0]  %s57, 2048, %s59, [#allocation9], 128, 128, 8
    $region17: #{tpu_custom_call.1} parent=1 // pred_fallthru
      _
    // Predicated region
    $region18: #{tpu_custom_call.1} parent=1 // pred_check
      _
    $region19: #{tpu_custom_call.1} parent=1 // pred_check_branch
      %66 = sbr.rel (0) target = $region21
    $region20: #{tpu_custom_call.1} parent=1 // pred_region
      %68 = dma.done [#allocation3], 256
    $region21: #{tpu_custom_call.1} parent=1 // pred_fallthru
      _
    // Predicated region
    $region22: #{tpu_custom_call.1} parent=1 // pred_check
      _
    $region23: #{tpu_custom_call.1} parent=1 // pred_check_branch
      %70 = sbr.rel (0) target = $region25
    $region24: #{tpu_custom_call.1} parent=1 // pred_region
      %72 = dma.done [#allocation6], 256
    $region25: #{tpu_custom_call.1} parent=1 // pred_fallthru
      _
    // Predicated region
    $region26: #{tpu_custom_call.1} parent=1 // pred_check
      _
    $region27: #{tpu_custom_call.1} parent=1 // pred_check_branch
      %74 = sbr.rel (0) target = $region29
    $region28: #{tpu_custom_call.1} parent=1 // pred_region
      %76 = dma.done [#allocation6], 1280
    $region29: #{tpu_custom_call.1} parent=1 // pred_fallthru
      _
    // Predicated region
    $region30: #{tpu_custom_call.1} parent=1 // pred_check
      _
    $region31: #{tpu_custom_call.1} parent=1 // pred_check_branch
      %78 = sbr.rel (0) target = $region33
    $region32: #{tpu_custom_call.1} parent=1 // pred_region
      %80 = dma.done [#allocation9], 2048
    $region33: #{tpu_custom_call.1} parent=1 // pred_fallthru
      _
    %v81 = vld [vmem:[#allocation2] sm:$0xff]
    %v82 = vld [vmem:[#allocation2 + $0x8] sm:$0xff]
    %v83 = vld [vmem:[#allocation5] sm:$0xff]
    %v84 = vld [vmem:[#allocation5 + $0x8] sm:$0xff]
    %v85 = vmul.f32 %v81, %v81
    %v86 = vmul.f32 %v82, %v82
    %v87 = vmul.f32 %v83, %v83
    %v88 = vmul.f32 %v84, %v84
    %v89 = vmul.f32 %v81, %v83
    %v90 = vmul.f32 %v82, %v84
    %v91 = vld [vmem:[#allocation7] sm:$0xff]
    %v92 = vld [vmem:[#allocation7 + $0x8] sm:$0xff]
    %v93 = vld [vmem:[#allocation7 + $0x10] sm:$0xff]
    %v94 = vld [vmem:[#allocation7 + $0x18] sm:$0xff]
    %v95 = vld [vmem:[#allocation7 + $0x20] sm:$0xff]
    %v96 = vld [vmem:[#allocation7 + $0x28] sm:$0xff]
    %v97 = vld [vmem:[#allocation7 + $0x30] sm:$0xff]
    %v98 = vld [vmem:[#allocation7 + $0x38] sm:$0xff]
    %v99 = vld [vmem:[#allocation7 + $0x40] sm:$0xff]
    %v100 = vld [vmem:[#allocation7 + $0x48] sm:$0xff]
    %vm101 = vcmask 654336
    %v103 = vsel %vm101, %v91, 0
    %v106 = vsel %vm101, %v92, 0
    %v109 = vsel %vm101, %v93, 0
    %v112 = vsel %vm101, %v94, 0
    %v115 = vsel %vm101, %v95, 0
    %v118 = vsel %vm101, %v96, 0
    %v121 = vsel %vm101, %v97, 0
    %v124 = vsel %vm101, %v98, 0
    %v127 = vsel %vm101, %v99, 0
    %v130 = vsel %vm101, %v100, 0
    %132 = vmatpush.msra.mxu0 0.0
    %133 = vmatpush.msra.mxu0 0.0
    %134 = vmatpush.msra.mxu0 0.0
    %135 = vmatpush.msra.mxu0 0.0
    %136 = vmatpush.msra.mxu0 0.0
    %137 = vmatpush.msra.mxu0 0.0
    %138 = vmatpush.msra.mxu0 %v90
    %139 = vmatpush.msra.mxu0 %v89
    %140 = vmatpush.msra.mxu0 %v88
    %141 = vmatpush.msra.mxu0 %v87
    %142 = vmatpush.msra.mxu0 %v86
    %143 = vmatpush.msra.mxu0 %v85
    %144 = vmatpush.msra.mxu0 %v84
    %145 = vmatpush.msra.mxu0 %v83
    %146 = vmatpush.msra.mxu0 %v82
    %147 = vmatpush.msra.mxu0 %v81
    %148 = vmatmul.f32.gmra.mxu0 %v103
    %v149 = vpop.f32.mrf.mxu0
    %v150 = vadd.f32 0.0, %v149
    %151 = vmatmul.f32.gmra.mxu0 %v106
    %v152 = vpop.f32.mrf.mxu0
    %v153 = vadd.f32 0.0, %v152
    %154 = vmatmul.f32.gmra.mxu0 %v109
    %v155 = vpop.f32.mrf.mxu0
    %v156 = vadd.f32 0.0, %v155
    %157 = vmatmul.f32.gmra.mxu0 %v112
    %v158 = vpop.f32.mrf.mxu0
    %v159 = vadd.f32 0.0, %v158
    %160 = vmatmul.f32.gmra.mxu0 %v115
    %v161 = vpop.f32.mrf.mxu0
    %v162 = vadd.f32 0.0, %v161
    %163 = vmatmul.f32.gmra.mxu0 %v118
    %v164 = vpop.f32.mrf.mxu0
    %v165 = vadd.f32 0.0, %v164
    %166 = vmatmul.f32.gmra.mxu0 %v121
    %v167 = vpop.f32.mrf.mxu0
    %v168 = vadd.f32 0.0, %v167
    %169 = vmatmul.f32.gmra.mxu0 %v124
    %v170 = vpop.f32.mrf.mxu0
    %v171 = vadd.f32 0.0, %v170
    %172 = vmatmul.f32.gmra.mxu0 %v127
    %v173 = vpop.f32.mrf.mxu0
    %v174 = vadd.f32 0.0, %v173
    %175 = vmatmul.f32.gmra.mxu0 %v130
    %v176 = vpop.f32.mrf.mxu0
    %v177 = vadd.f32 0.0, %v176
    %178 = vdwg.mxu0
    %v179 = vld [vmem:[#allocation8] sm:$0xff]
    %v180 = vld [vmem:[#allocation8 + $0x8] sm:$0xff]
    %v181 = vld [vmem:[#allocation8 + $0x10] sm:$0xff]
    %v182 = vld [vmem:[#allocation8 + $0x18] sm:$0xff]
    %v183 = vld [vmem:[#allocation8 + $0x20] sm:$0xff]
    %v184 = vld [vmem:[#allocation8 + $0x28] sm:$0xff]
    %v185 = vld [vmem:[#allocation8 + $0x30] sm:$0xff]
    %v186 = vld [vmem:[#allocation8 + $0x38] sm:$0xff]
    %v187 = vld [vmem:[#allocation8 + $0x40] sm:$0xff]
    %v188 = vld [vmem:[#allocation8 + $0x48] sm:$0xff]
    %v189 = vld [vmem:[#allocation8 + $0x50] sm:$0xff]
    %v190 = vld [vmem:[#allocation8 + $0x58] sm:$0xff]
    %v191 = vld [vmem:[#allocation8 + $0x60] sm:$0xff]
    %v192 = vld [vmem:[#allocation8 + $0x68] sm:$0xff]
    %v193 = vld [vmem:[#allocation8 + $0x70] sm:$0xff]
    %v194 = vld [vmem:[#allocation8 + $0x78] sm:$0xff]
    %195 = vmatpush.msra.mxu0 %v194
    %196 = vmatpush.msra.mxu0 %v193
    %197 = vmatpush.msra.mxu0 %v192
    %198 = vmatpush.msra.mxu0 %v191
    %199 = vmatpush.msra.mxu0 %v190
    %200 = vmatpush.msra.mxu0 %v189
    %201 = vmatpush.msra.mxu0 %v188
    %202 = vmatpush.msra.mxu0 %v187
    %203 = vmatpush.msra.mxu0 %v186
    %204 = vmatpush.msra.mxu0 %v185
    %205 = vmatpush.msra.mxu0 %v184
    %206 = vmatpush.msra.mxu0 %v183
    %207 = vmatpush.msra.mxu0 %v182
    %208 = vmatpush.msra.mxu0 %v181
    %209 = vmatpush.msra.mxu0 %v180
    %210 = vmatpush.msra.mxu0 %v179
    %211 = vmatmul.f32.gmra.mxu0 %v150
    %v212 = vpop.f32.mrf.mxu0
    %v213 = vadd.f32 0.0, %v212
    %214 = vmatmul.f32.gmra.mxu0 %v153
    %v215 = vpop.f32.mrf.mxu0
    %v216 = vadd.f32 0.0, %v215
    %217 = vmatmul.f32.gmra.mxu0 %v156
    %v218 = vpop.f32.mrf.mxu0
    %v219 = vadd.f32 0.0, %v218
    %220 = vmatmul.f32.gmra.mxu0 %v159
    %v221 = vpop.f32.mrf.mxu0
    %v222 = vadd.f32 0.0, %v221
    %223 = vmatmul.f32.gmra.mxu0 %v162
    %v224 = vpop.f32.mrf.mxu0
    %v225 = vadd.f32 0.0, %v224
    %226 = vmatmul.f32.gmra.mxu0 %v165
    %v227 = vpop.f32.mrf.mxu0
    %v228 = vadd.f32 0.0, %v227
    %229 = vmatmul.f32.gmra.mxu0 %v168
    %v230 = vpop.f32.mrf.mxu0
    %v231 = vadd.f32 0.0, %v230
    %232 = vmatmul.f32.gmra.mxu0 %v171
    %v233 = vpop.f32.mrf.mxu0
    %v234 = vadd.f32 0.0, %v233
    %235 = vmatmul.f32.gmra.mxu0 %v174
    %v236 = vpop.f32.mrf.mxu0
    %v237 = vadd.f32 0.0, %v236
    %238 = vmatmul.f32.gmra.mxu0 %v177
    %v239 = vpop.f32.mrf.mxu0
    %v240 = vadd.f32 0.0, %v239
    %241 = vdwg.mxu0
    %v242 = vmul.f32 %v213, %v213
    %v243 = vmul.f32 %v216, %v216
    %v244 = vmul.f32 %v219, %v219
    %v245 = vmul.f32 %v222, %v222
    %v246 = vmul.f32 %v213, %v219
    %v247 = vmul.f32 %v216, %v222
    %v248 = vsub.f32 %v225, %v242
    %v249 = vsub.f32 %v228, %v243
    %v250 = vsub.f32 %v231, %v244
    %v251 = vsub.f32 %v234, %v245
    %v252 = vsub.f32 %v237, %v246
    %v253 = vsub.f32 %v240, %v247
    %v254 = vmul.f32 %v246, 2.0
    %v255 = vmul.f32 %v247, 2.0
    %v256 = vadd.f32 %v254, 0.0001
    %v257 = vadd.f32 %v255, 0.0001
    %v258 = vmul.f32 %v252, 2.0
    %v259 = vmul.f32 %v253, 2.0
    %v260 = vadd.f32 %v258, 0.0009
    %v261 = vadd.f32 %v259, 0.0009
    %v262 = vmul.f32 %v256, %v260
    %v263 = vmul.f32 %v257, %v261
    %v264 = vadd.f32 %v242, %v244
    %v265 = vadd.f32 %v243, %v245
    %v266 = vadd.f32 %v264, 0.0001
    %v267 = vadd.f32 %v265, 0.0001
    %v268 = vadd.f32 %v248, %v250
    %v269 = vadd.f32 %v249, %v251
    %v270 = vadd.f32 %v268, 0.0009
    %v271 = vadd.f32 %v269, 0.0009
    %v272 = vmul.f32 %v266, %v270
    %v273 = vmul.f32 %v267, %v271
    %v274 = vrcp.pop %v272
    %v275 = vmul.f32 %v272, %v274
    %v276 = vsub.f32 1.0, %v275
    %v277 = vmul.f32 %v274, %v276
    %v278 = vadd.f32 %v274, %v277
    %vm279 = vweird.f32 %v272
    %vm280 = vweird.f32 %v274
    %vm281 = vmor %vm279, %vm280
    %v282 = vsel %vm281, %v274, %v278
    %v283 = vand.u32 2147483647, %v272
    %vm284 = vcmp.eq.f32.partialorder %v283, 8.507059e+37
    %v285 = vand.u32 %v272, 2147483648
    %v286 = vor.u32 1.1754944e-38, %v285
    %v287 = vsel %vm284, %v286, %v282
    %v288 = vrcp.pop %v273
    %v289 = vmul.f32 %v273, %v288
    %v290 = vsub.f32 1.0, %v289
    %v291 = vmul.f32 %v288, %v290
    %v292 = vadd.f32 %v288, %v291
    %vm293 = vweird.f32 %v273
    %vm294 = vweird.f32 %v288
    %vm295 = vmor %vm293, %vm294
    %v296 = vsel %vm295, %v288, %v292
    %v297 = vand.u32 2147483647, %v273
    %vm298 = vcmp.eq.f32.partialorder %v297, 8.507059e+37
    %v299 = vand.u32 %v273, 2147483648
    %v300 = vor.u32 1.1754944e-38, %v299
    %v301 = vsel %vm298, %v300, %v296
    %v302 = vmul.f32 %v262, %v287
    %v303 = vmul.f32 %v263, %v301
    %v304 = vadd.f32 %v302, %v303
    %v305 = vrot.slane %v304, 4
    %v306 = vadd.f32 %v304, %v305
    %v307 = vrot.slane %v306, 2
    %v308 = vadd.f32 %v306, %v307
    %v309 = vrot.slane %v308, 1
    %v310 = vadd.f32 %v308, %v309
    %311 = vst [vmem:[#allocation10] sm:$0x1] %v310
    // Predicated region
    $region34: #{tpu_custom_call.1} parent=1 // pred_check
      _
    $region35: #{tpu_custom_call.1} parent=1 // pred_check_branch
      %313 = sbr.rel (0) target = $region37
    $region36: #{tpu_custom_call.1} parent=1 // pred_region
      %315 = vsyncadd [#allocation4], 0
      %s317 = sshll.u32 [#allocation10], 4
      %s318 = int_to_ptr.vmem [resolvable:$true] %s317
      %s319 = sshll.u32 %s4, 4
      %s320 = int_to_ptr.hbm [resolvable:$true] %s319
      %322 = dma.vmem_to_hbm [thread:$0]  %s318, 16, %s320, [#allocation4]
    $region37: #{tpu_custom_call.1} parent=1 // pred_fallthru
      _
    // Predicated region
    $region38: #{tpu_custom_call.1} parent=1 // pred_check
      _
    $region39: #{tpu_custom_call.1} parent=1 // pred_check_branch
      %324 = sbr.rel (0) target = $region41
    $region40: #{tpu_custom_call.1} parent=1 // pred_region
      %326 = dma.done [#allocation4], 16
    $region41: #{tpu_custom_call.1} parent=1 // pred_fallthru
      _
    %327 = vsyncpa [#allocation3], 1
    %328 = vsyncpa [#allocation6], 1
    %329 = vsyncpa [#allocation9], 1
    %330 = vsyncpa [#allocation4], 1

</llo_original>
